<compile_context>
chip_gen: v5e
topology: v5e:2x2
jax: 0.10.0
libtpu: 0.0.40
codegen_flags: <defaults>
</compile_context>

<pallas_src>
import functools

import numpy as np
import jax
import jax.numpy as jnp
from jax.experimental import pallas as pl
from jax.experimental.pallas import tpu as pltpu

_VMEM_LIMIT = 32 * 1024 * 1024   # comfortably fits every tile set; headroom on v7x (64 MiB)
_TM = 512                        # matmul row tile
_TM_POOL = 512                   # pool row tile
_BN_EPS = 1e-3
_ACT_DTYPE = jnp.bfloat16        # MXU inputs / activations


# ---------------------------------------------------------------------------
# Pallas kernels
# ---------------------------------------------------------------------------
def _mm_bias_kernel(x_ref, w_ref, b_ref, o_ref):
    acc = jnp.dot(x_ref[...], w_ref[...], preferred_element_type=jnp.float32)
    o_ref[...] = (acc + b_ref[...]).astype(o_ref.dtype)


def _mm_bias_relu_kernel(x_ref, w_ref, b_ref, o_ref):
    acc = jnp.dot(x_ref[...], w_ref[...], preferred_element_type=jnp.float32)
    o_ref[...] = jnp.maximum(acc + b_ref[...], 0.0).astype(o_ref.dtype)


def _conv_tap_kernel(x_hbm, w_ref, b_ref, o_ref, xslab, sem, *, offs):
    """Direct stride-1 conv + folded-BN bias + ReLU for one row tile.

    x_hbm: flattened, spatially padded NHWC input left in HBM (memory_space=ANY).
    Each grid step copies rows [base, base + slab) into the VMEM scratch `xslab` with a
    single DMA, then accumulates the kh*kw tap matmuls using static row offsets into the
    slab (the taps of a stride-1 conv are pure row shifts of the flattened input).
    """
    bm = o_ref.shape[0]
    base = pl.program_id(0) * bm
    cp = pltpu.make_async_copy(x_hbm.at[pl.ds(base, xslab.shape[0])], xslab, sem.at[0])
    cp.start()
    cp.wait()
    acc = jnp.zeros(o_ref.shape, jnp.float32)
    for t, off in enumerate(offs):
        acc = acc + jnp.dot(xslab[pl.ds(off, bm), :], w_ref[t],
                            preferred_element_type=jnp.float32)
    o_ref[...] = jnp.maximum(acc + b_ref[...], 0.0).astype(o_ref.dtype)


def _pool_max_kernel(p_ref, o_ref):
    o_ref[...] = jnp.max(p_ref[...], axis=0)


def _avg_pool9_kernel(x_ref, o_ref):
    # x_ref block: (1, H+2, W+2, C) zero-padded; o block: (1, H, W, C).
    h, w = o_ref.shape[1], o_ref.shape[2]
    acc = x_ref[:, pl.ds(0, h), pl.ds(0, w), :].astype(jnp.float32)
    for i in range(3):
        for j in range(3):
            if i == 0 and j == 0:
                continue
            acc = acc + x_ref[:, pl.ds(i, h), pl.ds(j, w), :].astype(jnp.float32)
    o_ref[...] = (acc * (1.0 / 9.0)).astype(o_ref.dtype)


def _gap_kernel(x_ref, o_ref):
    # mean over spatial axis: (N, H*W, C) -> (N, C), accumulated in f32.
    o_ref[...] = jnp.mean(x_ref[...].astype(jnp.float32), axis=1)


# ---------------------------------------------------------------------------
# Pallas wrappers (jitted so identical shapes reuse compiled kernels)
# ---------------------------------------------------------------------------
def _row_tiling(m, tm):
    if m > tm:
        return ((m + tm - 1) // tm) * tm, tm
    mpad = ((m + 7) // 8) * 8
    return mpad, mpad


@functools.partial(jax.jit, static_argnames=("relu",))
def matmul_bias(x, w, bias, *, relu):
    """(M,K)@(K,N) on the MXU in bf16 (f32 accumulate) + per-column bias (+ optional ReLU)."""
    m, k = x.shape
    k2, n = w.shape
    assert k == k2
    x = x.astype(_ACT_DTYPE)
    w = w.astype(_ACT_DTYPE)
    b = bias.astype(jnp.float32).reshape(1, n)

    mpad, bm = _row_tiling(m, _TM)
    if mpad != m:
        x = jnp.pad(x, ((0, mpad - m), (0, 0)))
    if n > 256 and n % 256 == 0:
        bn = 256
    elif n > 128 and n % 128 == 0:
        bn = 128
    else:
        bn = n

    kernel = _mm_bias_relu_kernel if relu else _mm_bias_kernel
    out = pl.pallas_call(
        kernel,
        out_shape=jax.ShapeDtypeStruct((mpad, n), _ACT_DTYPE),
        grid=(mpad // bm, n // bn),
        in_specs=[
            pl.BlockSpec((bm, k), lambda i, j: (i, 0)),
            pl.BlockSpec((k, bn), lambda i, j: (0, j)),
            pl.BlockSpec((1, bn), lambda i, j: (0, j)),
        ],
        out_specs=pl.BlockSpec((bm, bn), lambda i, j: (i, j)),
        compiler_params=pltpu.CompilerParams(
            dimension_semantics=("parallel", "parallel"),
            vmem_limit_bytes=_VMEM_LIMIT,
        ),
    )(x, w, b)
    return out[:m]


@functools.partial(jax.jit, static_argnames=("kh", "kw", "ph", "pw"))
def conv2d_s1_fused(x, w_taps, bias, *, kh, kw, ph, pw):
    """Stride-1 Conv2d + folded BN + ReLU without HBM im2col (per-tile halo DMA)."""
    n, h, w, cin = x.shape
    taps, cin2, cout = w_taps.shape
    assert cin == cin2 and taps == kh * kw
    hp, wp = h + 2 * ph, w + 2 * pw
    ho, wo = hp - kh + 1, wp - kw + 1

    xp = jnp.pad(x.astype(_ACT_DTYPE), ((0, 0), (ph, ph), (pw, pw), (0, 0)))
    xf = xp.reshape(n * hp * wp, cin)
    m_out = n * hp * wp

    # row tile: aim for ~0.5 MiB of bf16 slab per step, capped by problem size
    bm = (512 * 1024) // (cin * 2)
    bm = max(256, min(2048, (bm // 256) * 256))
    bm = min(bm, ((m_out + 255) // 256) * 256)
    m_alloc = ((m_out + bm - 1) // bm) * bm
    max_off = (kh - 1) * wp + (kw - 1)
    slab = ((bm + max_off + 7) // 8) * 8
    xf = jnp.pad(xf, ((0, (m_alloc - bm + slab) - m_out), (0, 0)))

    offs = tuple(i * wp + j for i in range(kh) for j in range(kw))
    kernel = functools.partial(_conv_tap_kernel, offs=offs)
    out = pl.pallas_call(
        kernel,
        out_shape=jax.ShapeDtypeStruct((m_alloc, cout), _ACT_DTYPE),
        grid=(m_alloc // bm,),
        in_specs=[
            pl.BlockSpec(memory_space=pl.ANY),                      # x stays in HBM
            pl.BlockSpec((taps, cin, cout), lambda i: (0, 0, 0)),   # weights resident in VMEM
            pl.BlockSpec((1, cout), lambda i: (0, 0)),
        ],
        out_specs=pl.BlockSpec((bm, cout), lambda i: (i, 0)),
        scratch_shapes=[
            pltpu.VMEM((slab, cin), _ACT_DTYPE),
            pltpu.SemaphoreType.DMA((1,)),
        ],
        compiler_params=pltpu.CompilerParams(
            dimension_semantics=("parallel",),
            vmem_limit_bytes=_VMEM_LIMIT,
        ),
    )(xf, w_taps.astype(_ACT_DTYPE), bias.astype(jnp.float32).reshape(1, cout))
    out = out[:m_out].reshape(n, hp, wp, cout)
    return out[:, :ho, :wo, :]


@jax.jit
def max_pool_3x3_s2(x):
    """MaxPool2d(kernel=3, stride=2) via a Pallas window reduction."""
    n, h, w, c = x.shape
    ho, wo = (h - 3) // 2 + 1, (w - 3) // 2 + 1
    slices = [x[:, i:i + 2 * ho:2, j:j + 2 * wo:2, :] for i in range(3) for j in range(3)]
    patches = jnp.stack(slices, axis=0).reshape(9, n * ho * wo, c)
    m = n * ho * wo
    mpad, bm = _row_tiling(m, _TM_POOL)
    if mpad != m:
        patches = jnp.pad(patches, ((0, 0), (0, mpad - m), (0, 0)))
    out = pl.pallas_call(
        _pool_max_kernel,
        out_shape=jax.ShapeDtypeStruct((mpad, c), x.dtype),
        grid=(mpad // bm,),
        in_specs=[pl.BlockSpec((9, bm, c), lambda i: (0, i, 0))],
        out_specs=pl.BlockSpec((bm, c), lambda i: (i, 0)),
        compiler_params=pltpu.CompilerParams(
            dimension_semantics=("parallel",),
            vmem_limit_bytes=_VMEM_LIMIT,
        ),
    )(patches)
    return out[:m].reshape(n, ho, wo, c)


@jax.jit
def avg_pool_3x3_s1_p1(x):
    """F.avg_pool2d(3, stride=1, padding=1), count_include_pad=True; fused 9-tap window sum."""
    n, h, w, c = x.shape
    xp = jnp.pad(x, ((0, 0), (1, 1), (1, 1), (0, 0)))
    return pl.pallas_call(
        _avg_pool9_kernel,
        out_shape=jax.ShapeDtypeStruct((n, h, w, c), x.dtype),
        grid=(n,),
        in_specs=[pl.BlockSpec((1, h + 2, w + 2, c), lambda b: (b, 0, 0, 0))],
        out_specs=pl.BlockSpec((1, h, w, c), lambda b: (b, 0, 0, 0)),
        compiler_params=pltpu.CompilerParams(
            dimension_semantics=("parallel",),
            vmem_limit_bytes=_VMEM_LIMIT,
        ),
    )(xp)


@jax.jit
def global_avg_pool(x):
    """AdaptiveAvgPool2d((1,1)): (N,H,W,C) -> (N,C) in f32."""
    n, h, w, c = x.shape
    xr = x.reshape(n, h * w, c)
    return pl.pallas_call(
        _gap_kernel,
        out_shape=jax.ShapeDtypeStruct((n, c), jnp.float32),
        grid=(1,),
        in_specs=[pl.BlockSpec((n, h * w, c), lambda i: (0, 0, 0))],
        out_specs=pl.BlockSpec((n, c), lambda i: (0, 0)),
        compiler_params=pltpu.CompilerParams(vmem_limit_bytes=_VMEM_LIMIT),
    )(xr)


# ---------------------------------------------------------------------------
# Layer helpers
# ---------------------------------------------------------------------------
def basic_conv2d(p, x, stride=1, padding=(0, 0)):
    """Conv2d(bias=False) + BatchNorm(eval, folded into weights) + ReLU on NHWC input."""
    kh, kw = p["ksize"]
    n, h, w, cin = x.shape
    ph, pw = padding
    cout = p["bias"].shape[0]
    if kh == 1 and kw == 1 and stride == 1:
        out = matmul_bias(x.reshape(n * h * w, cin), p["w"].reshape(cin, cout),
                          p["bias"], relu=True)
        return out.reshape(n, h, w, cout)
    if stride == 1:
        return conv2d_s1_fused(x, p["w"], p["bias"], kh=kh, kw=kw, ph=ph, pw=pw)
    # strided convs (only 5 small layers) fall back to im2col + Pallas matmul
    ho = (h + 2 * ph - kh) // stride + 1
    wo = (w + 2 * pw - kw) // stride + 1
    xp = jnp.pad(x, ((0, 0), (ph, ph), (pw, pw), (0, 0)))
    slices = [
        xp[:, i:i + stride * ho:stride, j:j + stride * wo:stride, :]
        for i in range(kh) for j in range(kw)
    ]
    patches = jnp.stack(slices, axis=3).reshape(n * ho * wo, kh * kw * cin)
    out = matmul_bias(patches, p["w"].reshape(kh * kw * cin, cout), p["bias"], relu=True)
    return out.reshape(n, ho, wo, cout)


def _bilinear_matrix(in_size, out_size):
    # PyTorch F.interpolate(mode='bilinear', align_corners=False) index/weight math.
    scale = in_size / out_size
    i = np.arange(out_size, dtype=np.float64)
    src = np.maximum((i + 0.5) * scale - 0.5, 0.0)
    i0 = np.minimum(np.floor(src).astype(np.int64), in_size - 1)
    i1 = np.minimum(i0 + 1, in_size - 1)
    frac = src - i0
    m = np.zeros((out_size, in_size), dtype=np.float32)
    m[np.arange(out_size), i0] += (1.0 - frac).astype(np.float32)
    m[np.arange(out_size), i1] += frac.astype(np.float32)
    return m


def resize_299_and_normalize(x_nchw, normalize):
    """Bilinear resize to 299x299 as two Pallas matmuls (H first, no full-size transposes);
    the 2*x-1 normalization is folded into the second matmul."""
    n, c, h, w = x_nchw.shape
    out = 299
    mh = jnp.asarray(_bilinear_matrix(h, out))   # (299, h)
    mw = jnp.asarray(_bilinear_matrix(w, out))   # (299, w)
    zeros = jnp.zeros((out,), jnp.float32)
    # interpolate along H (contraction over h), rows = (n, c, w)
    xt = jnp.transpose(x_nchw, (0, 1, 3, 2)).reshape(n * c * w, h)
    y = matmul_bias(xt, mh.T, zeros, relu=False).reshape(n, c, w, out)
    # interpolate along W (contraction over w), rows = (n, c, 299h); fuse 2*x-1
    yt = jnp.transpose(y, (0, 1, 3, 2)).reshape(n * c * out, w)
    w2 = mw.T * (2.0 if normalize else 1.0)
    b2 = jnp.full((out,), -1.0 if normalize else 0.0, jnp.float32)
    z = matmul_bias(yt, w2, b2, relu=False)
    return z.reshape(n, c, out, out)   # (N, C, 299, 299)


# ---------------------------------------------------------------------------
# Parameters (deterministic synthetic weights; eval-mode BN folded into weights)
# ---------------------------------------------------------------------------
def _make_bconv(key, cin, cout, kh, kw):
    fan_in = cin * kh * kw
    w = jax.random.normal(key, (kh, kw, cin, cout), jnp.float32) * np.sqrt(2.0 / fan_in)
    # eval-mode BN fold (gamma=1, beta=0, mean=0, var=1): scale goes into the weight columns
    w = w * np.float32(1.0 / np.sqrt(1.0 + _BN_EPS))
    return {"w": w.reshape(kh * kw, cin, cout).astype(_ACT_DTYPE),
            "bias": jnp.zeros((cout,), jnp.float32),
            "ksize": (kh, kw)}


def init_params(key):
    keys = iter(jax.random.split(key, 128))
    bconv = lambda cin, cout, kh, kw: _make_bconv(next(keys), cin, cout, kh, kw)

    def inc_a(cin, pool):
        return {"b1": bconv(cin, 64, 1, 1),
                "b5_1": bconv(cin, 48, 1, 1), "b5_2": bconv(48, 64, 5, 5),
                "b3d_1": bconv(cin, 64, 1, 1), "b3d_2": bconv(64, 96, 3, 3),
                "b3d_3": bconv(96, 96, 3, 3),
                "bp": bconv(cin, pool, 1, 1)}

    def inc_b(cin):
        return {"b3": bconv(cin, 384, 3, 3),
                "b3d_1": bconv(cin, 64, 1, 1), "b3d_2": bconv(64, 96, 3, 3),
                "b3d_3": bconv(96, 96, 3, 3)}

    def inc_c(cin, c7):
        return {"b1": bconv(cin, 192, 1, 1),
                "b7_1": bconv(cin, c7, 1, 1), "b7_2": bconv(c7, c7, 1, 7), "b7_3": bconv(c7, 192, 7, 1),
                "b7d_1": bconv(cin, c7, 1, 1), "b7d_2": bconv(c7, c7, 7, 1), "b7d_3": bconv(c7, c7, 1, 7),
                "b7d_4": bconv(c7, c7, 7, 1), "b7d_5": bconv(c7, 192, 1, 7),
                "bp": bconv(cin, 192, 1, 1)}

    def inc_d(cin):
        return {"b3_1": bconv(cin, 192, 1, 1), "b3_2": bconv(192, 320, 3, 3),
                "b7_1": bconv(cin, 192, 1, 1), "b7_2": bconv(192, 192, 1, 7),
                "b7_3": bconv(192, 192, 7, 1), "b7_4": bconv(192, 192, 3, 3)}

    def inc_e(cin):
        return {"b1": bconv(cin, 320, 1, 1),
                "b3_1": bconv(cin, 384, 1, 1), "b3_2a": bconv(384, 384, 1, 3), "b3_2b": bconv(384, 384, 3, 1),
                "b3d_1": bconv(cin, 448, 1, 1), "b3d_2": bconv(448, 384, 3, 3),
                "b3d_3a": bconv(384, 384, 1, 3), "b3d_3b": bconv(384, 384, 3, 1),
                "bp": bconv(cin, 192, 1, 1)}

    return {
        "conv1a": bconv(3, 32, 3, 3), "conv2a": bconv(32, 32, 3, 3), "conv2b": bconv(32, 64, 3, 3),
        "conv3b": bconv(64, 80, 1, 1), "conv4a": bconv(80, 192, 3, 3),
        "mixed_5b": inc_a(192, 32), "mixed_5c": inc_a(256, 64), "mixed_5d": inc_a(288, 64),
        "mixed_6a": inc_b(288),
        "mixed_6b": inc_c(768, 128), "mixed_6c": inc_c(768, 160),
        "mixed_6d": inc_c(768, 160), "mixed_6e": inc_c(768, 192),
        "mixed_7a": inc_d(768), "mixed_7b": inc_e(1280), "mixed_7c": inc_e(2048),
    }


# ---------------------------------------------------------------------------
# Inception blocks (forward)
# ---------------------------------------------------------------------------
def inception_a_fwd(p, x):
    b1 = basic_conv2d(p["b1"], x)
    b5 = basic_conv2d(p["b5_1"], x)
    b5 = basic_conv2d(p["b5_2"], b5, padding=(2, 2))
    b3 = basic_conv2d(p["b3d_1"], x)
    b3 = basic_conv2d(p["b3d_2"], b3, padding=(1, 1))
    b3 = basic_conv2d(p["b3d_3"], b3, padding=(1, 1))
    bp = basic_conv2d(p["bp"], avg_pool_3x3_s1_p1(x))
    return jnp.concatenate([b1, b5, b3, bp], axis=-1)


def inception_b_fwd(p, x):
    b3 = basic_conv2d(p["b3"], x, stride=2)
    bd = basic_conv2d(p["b3d_1"], x)
    bd = basic_conv2d(p["b3d_2"], bd, padding=(1, 1))
    bd = basic_conv2d(p["b3d_3"], bd, stride=2)
    bp = max_pool_3x3_s2(x)
    return jnp.concatenate([b3, bd, bp], axis=-1)


def inception_c_fwd(p, x):
    b1 = basic_conv2d(p["b1"], x)
    b7 = basic_conv2d(p["b7_1"], x)
    b7 = basic_conv2d(p["b7_2"], b7, padding=(0, 3))
    b7 = basic_conv2d(p["b7_3"], b7, padding=(3, 0))
    bd = basic_conv2d(p["b7d_1"], x)
    bd = basic_conv2d(p["b7d_2"], bd, padding=(3, 0))
    bd = basic_conv2d(p["b7d_3"], bd, padding=(0, 3))
    bd = basic_conv2d(p["b7d_4"], bd, padding=(3, 0))
    bd = basic_conv2d(p["b7d_5"], bd, padding=(0, 3))
    bp = basic_conv2d(p["bp"], avg_pool_3x3_s1_p1(x))
    return jnp.concatenate([b1, b7, bd, bp], axis=-1)


def inception_d_fwd(p, x):
    b3 = basic_conv2d(p["b3_1"], x)
    b3 = basic_conv2d(p["b3_2"], b3, stride=2)
    b7 = basic_conv2d(p["b7_1"], x)
    b7 = basic_conv2d(p["b7_2"], b7, padding=(0, 3))
    b7 = basic_conv2d(p["b7_3"], b7, padding=(3, 0))
    b7 = basic_conv2d(p["b7_4"], b7, stride=2)
    bp = max_pool_3x3_s2(x)
    return jnp.concatenate([b3, b7, bp], axis=-1)


def inception_e_fwd(p, x):
    b1 = basic_conv2d(p["b1"], x)
    b3 = basic_conv2d(p["b3_1"], x)
    b3 = jnp.concatenate([basic_conv2d(p["b3_2a"], b3, padding=(0, 1)),
                          basic_conv2d(p["b3_2b"], b3, padding=(1, 0))], axis=-1)
    bd = basic_conv2d(p["b3d_1"], x)
    bd = basic_conv2d(p["b3d_2"], bd, padding=(1, 1))
    bd = jnp.concatenate([basic_conv2d(p["b3d_3a"], bd, padding=(0, 1)),
                          basic_conv2d(p["b3d_3b"], bd, padding=(1, 0))], axis=-1)
    bp = basic_conv2d(p["bp"], avg_pool_3x3_s1_p1(x))
    return jnp.concatenate([b1, b3, bd, bp], axis=-1)


# ---------------------------------------------------------------------------
# InceptionV3.forward
# ---------------------------------------------------------------------------
def inception_v3_forward(params, inp, output_blocks=(3,), resize_input=True, normalize_input=True):
    """inp: (B, 3, H, W) float32 in (0,1). Returns list of NCHW feature maps (f32)."""
    output_blocks = sorted(output_blocks)
    last = max(output_blocks)
    outs = []

    x = inp
    if resize_input:
        x = resize_299_and_normalize(x, normalize=normalize_input)
    elif normalize_input:
        x = 2.0 * x - 1.0
    x = jnp.transpose(x, (0, 2, 3, 1)).astype(_ACT_DTYPE)   # NCHW -> NHWC bf16 activations

    def emit(feat):
        outs.append(jnp.transpose(feat, (0, 3, 1, 2)).astype(jnp.float32))

    # block 0
    x = basic_conv2d(params["conv1a"], x, stride=2)
    x = basic_conv2d(params["conv2a"], x)
    x = basic_conv2d(params["conv2b"], x, padding=(1, 1))
    x = max_pool_3x3_s2(x)
    if 0 in output_blocks:
        emit(x)
    if last == 0:
        return outs

    # block 1
    x = basic_conv2d(params["conv3b"], x)
    x = basic_conv2d(params["conv4a"], x)
    x = max_pool_3x3_s2(x)
    if 1 in output_blocks:
        emit(x)
    if last == 1:
        return outs

    # block 2
    x = inception_a_fwd(params["mixed_5b"], x)
    x = inception_a_fwd(params["mixed_5c"], x)
    x = inception_a_fwd(params["mixed_5d"], x)
    x = inception_b_fwd(params["mixed_6a"], x)
    x = inception_c_fwd(params["mixed_6b"], x)
    x = inception_c_fwd(params["mixed_6c"], x)
    x = inception_c_fwd(params["mixed_6d"], x)
    x = inception_c_fwd(params["mixed_6e"], x)
    if 2 in output_blocks:
        emit(x)
    if last == 2:
        return outs

    # block 3
    x = inception_d_fwd(params["mixed_7a"], x)
    x = inception_e_fwd(params["mixed_7b"], x)
    x = inception_e_fwd(params["mixed_7c"], x)
    x = global_avg_pool(x)                       # (N, 2048) f32
    x = x.reshape(x.shape[0], x.shape[1], 1, 1)  # (N, 2048, 1, 1) NCHW, like PyTorch
    if 3 in output_blocks:
        outs.append(x)
    return outs


if __name__ == "__main__":
    key = jax.random.PRNGKey(0)
    pkey, xkey = jax.random.split(key)
    params = init_params(pkey)
    # Input: Bx3xHxW with values in (0,1), as expected by the module (resized to 299 inside).
    x = jax.random.uniform(xkey, (2, 3, 16, 16), dtype=jnp.float32)
    outs = inception_v3_forward(params, x, output_blocks=(3,))
    outs = jax.block_until_ready(outs)
    assert len(outs) == 1 and outs[0].shape == (2, 2048, 1, 1)
    assert bool(jnp.all(jnp.isfinite(outs[0])))
    print("KERNEL_OK")
</pallas_src>

<mosaic_0001>
module attributes {stable_mosaic.version = 11 : i64} {
  func.func @_mm_bias_kernel(%arg0: i32, %arg1: i32, %arg2: memref<96x16xbf16, #tpu.memory_space<vmem>>, %arg3: memref<16x299xbf16, #tpu.memory_space<vmem>>, %arg4: memref<1x299xf32, #tpu.memory_space<vmem>>, %arg5: memref<96x299xbf16, #tpu.memory_space<vmem>>) attributes {dimension_semantics = [#tpu.dimension_semantics<parallel>, #tpu.dimension_semantics<parallel>], iteration_bounds = array<i64: 1, 1>, scalar_prefetch = 0 : i64, scratch_operands = 0 : i64, tpu.core_type = #tpu.core_type<tc>, window_params = [{transform_indices = @transform_0, window_bounds = array<i64: 96, 16>}, {transform_indices = @transform_1, window_bounds = array<i64: 16, 299>}, {transform_indices = @transform_2, window_bounds = array<i64: 1, 299>}, {transform_indices = @transform_3, window_bounds = array<i64: 96, 299>}]} {
    %c0 = arith.constant 0 : index
    %c0_0 = arith.constant 0 : index
    %0 = vector.load %arg2[%c0, %c0_0] : memref<96x16xbf16, #tpu.memory_space<vmem>>, vector<96x16xbf16>
    %c0_1 = arith.constant 0 : index
    %c0_2 = arith.constant 0 : index
    %1 = vector.load %arg3[%c0_1, %c0_2] : memref<16x299xbf16, #tpu.memory_space<vmem>>, vector<16x299xbf16>
    %cst = arith.constant dense<0.000000e+00> : vector<96x299xf32>
    %2 = tpu.matmul %0, %1, %cst {dimension_numbers = #tpu.dot_dimension_numbers<[1], [0], [0], [1], [0, 0, 1, 1], [], []>} : vector<96x16xbf16>, vector<16x299xbf16>, vector<96x299xf32> -> vector<96x299xf32>
    %c0_3 = arith.constant 0 : index
    %c0_4 = arith.constant 0 : index
    %3 = vector.load %arg4[%c0_3, %c0_4] : memref<1x299xf32, #tpu.memory_space<vmem>>, vector<1x299xf32>
    %4 = vector.broadcast %3 : vector<1x299xf32> to vector<96x299xf32>
    %5 = arith.addf %2, %4 : vector<96x299xf32>
    %6 = arith.truncf %5 : vector<96x299xf32> to vector<96x299xbf16>
    %c0_5 = arith.constant 0 : index
    %c0_6 = arith.constant 0 : index
    %7 = vector.load %arg5[%c0_5, %c0_6] : memref<96x299xbf16, #tpu.memory_space<vmem>>, vector<96x299xbf16>
    tpu.vector_store %arg5[%c0_5, %c0_6], %6 {strides = array<i32>} : memref<96x299xbf16, #tpu.memory_space<vmem>>, vector<96x299xbf16>,
    return
  }
  func.func @transform_0(%arg0: i32, %arg1: i32) -> (i32, i32) {
    %c0_i32 = arith.constant 0 : i32
    %c0_i32_0 = arith.constant 0 : i32
    return %arg0, %c0_i32 : i32, i32
  }
  func.func @transform_1(%arg0: i32, %arg1: i32) -> (i32, i32) {
    %c0_i32 = arith.constant 0 : i32
    %c0_i32_0 = arith.constant 0 : i32
    return %c0_i32, %arg1 : i32, i32
  }
  func.func @transform_2(%arg0: i32, %arg1: i32) -> (i32, i32) {
    %c0_i32 = arith.constant 0 : i32
    %c0_i32_0 = arith.constant 0 : i32
    return %c0_i32, %arg1 : i32, i32
  }
  func.func @transform_3(%arg0: i32, %arg1: i32) -> (i32, i32) {
    %c0_i32 = arith.constant 0 : i32
    return %arg0, %arg1 : i32, i32
  }
}

</mosaic_0001>

<llo_original>
// kernel: matmul_bias.1
$region0: #{matmul_bias.1}
  #allocation0 [shape = 'u32[]', space=smem, size = 0x4, offset = 0x4, fixed_abs, tag = 'smem constant byte address 0x4 - core index']
  #allocation1 [shape = 'u32[72,128]{1,0:T(1,128)}', space=vmem, size = 0x9000, scoped, tag = 'internal scratch']
  %s0 = inlined_call_operand.vmem [shape: bf16[96,16], index: 0, kind: input, shape index: {}]
  %s1 = inlined_call_operand.vmem [shape: bf16[16,299], index: 1, kind: input, shape index: {}]
  %s2 = inlined_call_operand.vmem [shape: f32[1,299], index: 2, kind: input, shape index: {}]
  %s3 = inlined_call_operand.hbm [shape: bf16[96,299], index: 3, kind: output, shape index: {}]
  %s4 = sld [smem:[#allocation0]]
  $region22: #{matmul_bias.1} parent=0
    _
  %s6 = ssub.s32 1, %s4
  %s7 = scalar_select 0, %s6, %s4
  $region1: #{matmul_bias.1} parent=0
    #allocation2 [shape = 'u8[73728]{0}', space=vmem, size = 0x12000, scoped, tag = 'output window, operand 0, single buffered']
    #allocation3 [shape = 's32[1]{0}', space=sflag, size = 0x4, scoped, tag = 'scoped memory for matmul_bias.1']
    %8 = vsyncpa [#allocation3], 0
    // Predicated region
    $region2: #{matmul_bias.1} parent=1 // pred_check
      _
    $region3: #{matmul_bias.1} parent=1 // pred_check_branch
      %10 = sbr.rel (0) target = $region5
    $region4: #{matmul_bias.1} parent=1 // pred_region
      _
    $region5: #{matmul_bias.1} parent=1 // pred_fallthru
      _
    // Predicated region
    $region6: #{matmul_bias.1} parent=1 // pred_check
      _
    $region7: #{matmul_bias.1} parent=1 // pred_check_branch
      %12 = sbr.rel (0) target = $region9
    $region8: #{matmul_bias.1} parent=1 // pred_region
      _
    $region9: #{matmul_bias.1} parent=1 // pred_fallthru
      _
    // Predicated region
    $region10: #{matmul_bias.1} parent=1 // pred_check
      _
    $region11: #{matmul_bias.1} parent=1 // pred_check_branch
      %14 = sbr.rel (0) target = $region13
    $region12: #{matmul_bias.1} parent=1 // pred_region
      _
    $region13: #{matmul_bias.1} parent=1 // pred_fallthru
      _
    %v16 = vld [vmem:[%s0] sm:$0xf]
    %v17 = vld [vmem:[%s0 + $0x4] sm:$0xf]
    %v18 = vld [vmem:[%s0 + $0x8] sm:$0xf]
    %v19 = vld [vmem:[%s0 + $0xc] sm:$0xf]
    %v20 = vld [vmem:[%s0 + $0x10] sm:$0xf]
    %v21 = vld [vmem:[%s0 + $0x14] sm:$0xf]
    %v22 = vld [vmem:[%s0 + $0x18] sm:$0xf]
    %v23 = vld [vmem:[%s0 + $0x1c] sm:$0xf]
    %v24 = vld [vmem:[%s0 + $0x20] sm:$0xf]
    %v25 = vld [vmem:[%s0 + $0x24] sm:$0xf]
    %v26 = vld [vmem:[%s0 + $0x28] sm:$0xf]
    %v27 = vld [vmem:[%s0 + $0x2c] sm:$0xf]
    %v28 = vld [vmem:[%s1] sm:$0xff]
    %v29 = vld [vmem:[%s1 + $0x8] sm:$0xf]
    %v30 = vld [vmem:[%s1 + $0xc] sm:$0xff]
    %v31 = vld [vmem:[%s1 + $0x14] sm:$0xf]
    %v32 = vld [vmem:[%s2] sm:$0x7]
    %v34 = vperm.slane %v32, 0
    %v35 = vperm.slane %v32, 1
    %v36 = vperm.slane %v32, 2
    %v52 = vunpack.c.l.b16 %v16
    %v53 = vunpack.c.l.b16 %v17
    %v54 = vunpack.c.l.b16 %v18
    %v55 = vunpack.c.l.b16 %v19
    %v56 = vunpack.c.l.b16 %v20
    %v57 = vunpack.c.l.b16 %v21
    %v58 = vunpack.c.l.b16 %v22
    %v59 = vunpack.c.l.b16 %v23
    %v60 = vunpack.c.l.b16 %v24
    %v61 = vunpack.c.l.b16 %v25
    %v62 = vunpack.c.l.b16 %v26
    %v63 = vunpack.c.l.b16 %v27
    %v64 = vpack.c.b16 %v53, %v52
    %v65 = vpack.c.b16 %v55, %v54
    %v66 = vpack.c.b16 %v57, %v56
    %v67 = vpack.c.b16 %v59, %v58
    %v68 = vpack.c.b16 %v61, %v60
    %v69 = vpack.c.b16 %v63, %v62
    %v74 = vunpack.c.l.b16 %v28
    %v75 = vunpack.c.h.b16 %v28
    %v76 = vunpack.c.l.b16 %v29
    %v77 = vunpack.c.l.b16 %v30
    %v78 = vunpack.c.h.b16 %v30
    %v79 = vunpack.c.l.b16 %v31
    %v80 = vpack.c.b16 %v77, %v74
    %v81 = vpack.c.b16 %v78, %v75
    %v82 = vpack.c.b16 %v79, %v76
    %vm86 = vcmask 130048
    %v88 = vsel %vm86, %v64, 0
    %v91 = vsel %vm86, %v65, 0
    %v94 = vsel %vm86, %v66, 0
    %v97 = vsel %vm86, %v67, 0
    %v100 = vsel %vm86, %v68, 0
    %v103 = vsel %vm86, %v69, 0
    %105 = vmatpush.bf16.msra.mxu0 0
    %106 = vmatpush.bf16.msra.mxu0 0
    %107 = vmatpush.bf16.msra.mxu0 0
    %108 = vmatpush.bf16.msra.mxu0 0
    %109 = vmatpush.bf16.msra.mxu0 0
    %110 = vmatpush.bf16.msra.mxu0 0
    %111 = vmatpush.bf16.msra.mxu0 0
    %112 = vmatpush.bf16.msra.mxu0 %v80
    %113 = vmatmul.bf16.gmra.mxu0 %v88
    %v114 = vpop.f32.mrf.mxu0
    %v115 = vadd.f32 %v34, %v114
    %v116 = vpop.f32.mrf.mxu0
    %v117 = vadd.f32 %v34, %v116
    %118 = vmatmul.bf16.gmra.mxu0 %v91
    %v119 = vpop.f32.mrf.mxu0
    %v120 = vadd.f32 %v34, %v119
    %v121 = vpop.f32.mrf.mxu0
    %v122 = vadd.f32 %v34, %v121
    %123 = vmatmul.bf16.gmra.mxu0 %v94
    %v124 = vpop.f32.mrf.mxu0
    %v125 = vadd.f32 %v34, %v124
    %v126 = vpop.f32.mrf.mxu0
    %v127 = vadd.f32 %v34, %v126
    %128 = vmatmul.bf16.gmra.mxu0 %v97
    %v129 = vpop.f32.mrf.mxu0
    %v130 = vadd.f32 %v34, %v129
    %v131 = vpop.f32.mrf.mxu0
    %v132 = vadd.f32 %v34, %v131
    %133 = vmatmul.bf16.gmra.mxu0 %v100
    %v134 = vpop.f32.mrf.mxu0
    %v135 = vadd.f32 %v34, %v134
    %v136 = vpop.f32.mrf.mxu0
    %v137 = vadd.f32 %v34, %v136
    %138 = vmatmul.bf16.gmra.mxu0 %v103
    %v139 = vpop.f32.mrf.mxu0
    %v140 = vadd.f32 %v34, %v139
    %v141 = vpop.f32.mrf.mxu0
    %v142 = vadd.f32 %v34, %v141
    %143 = vdwg.mxu0
    %144 = vmatpush.bf16.msra.mxu0 0
    %145 = vmatpush.bf16.msra.mxu0 0
    %146 = vmatpush.bf16.msra.mxu0 0
    %147 = vmatpush.bf16.msra.mxu0 0
    %148 = vmatpush.bf16.msra.mxu0 0
    %149 = vmatpush.bf16.msra.mxu0 0
    %150 = vmatpush.bf16.msra.mxu0 0
    %151 = vmatpush.bf16.msra.mxu0 %v81
    %152 = vmatmul.bf16.gmra.mxu0 %v88
    %v153 = vpop.f32.mrf.mxu0
    %v154 = vadd.f32 %v35, %v153
    %v155 = vpop.f32.mrf.mxu0
    %v156 = vadd.f32 %v35, %v155
    %157 = vmatmul.bf16.gmra.mxu0 %v91
    %v158 = vpop.f32.mrf.mxu0
    %v159 = vadd.f32 %v35, %v158
    %v160 = vpop.f32.mrf.mxu0
    %v161 = vadd.f32 %v35, %v160
    %162 = vmatmul.bf16.gmra.mxu0 %v94
    %v163 = vpop.f32.mrf.mxu0
    %v164 = vadd.f32 %v35, %v163
    %v165 = vpop.f32.mrf.mxu0
    %v166 = vadd.f32 %v35, %v165
    %167 = vmatmul.bf16.gmra.mxu0 %v97
    %v168 = vpop.f32.mrf.mxu0
    %v169 = vadd.f32 %v35, %v168
    %v170 = vpop.f32.mrf.mxu0
    %v171 = vadd.f32 %v35, %v170
    %172 = vmatmul.bf16.gmra.mxu0 %v100
    %v173 = vpop.f32.mrf.mxu0
    %v174 = vadd.f32 %v35, %v173
    %v175 = vpop.f32.mrf.mxu0
    %v176 = vadd.f32 %v35, %v175
    %177 = vmatmul.bf16.gmra.mxu0 %v103
    %v178 = vpop.f32.mrf.mxu0
    %v179 = vadd.f32 %v35, %v178
    %v180 = vpop.f32.mrf.mxu0
    %v181 = vadd.f32 %v35, %v180
    %182 = vdwg.mxu0
    %183 = vmatpush.bf16.msra.mxu0 0
    %184 = vmatpush.bf16.msra.mxu0 0
    %185 = vmatpush.bf16.msra.mxu0 0
    %186 = vmatpush.bf16.msra.mxu0 0
    %187 = vmatpush.bf16.msra.mxu0 0
    %188 = vmatpush.bf16.msra.mxu0 0
    %189 = vmatpush.bf16.msra.mxu0 0
    %190 = vmatpush.bf16.msra.mxu0 %v82
    %191 = vmatmul.bf16.gmra.mxu0 %v88
    %v192 = vpop.f32.mrf.mxu0
    %v193 = vadd.f32 %v36, %v192
    %v194 = vpop.f32.mrf.mxu0
    %v195 = vadd.f32 %v36, %v194
    %196 = vmatmul.bf16.gmra.mxu0 %v91
    %v197 = vpop.f32.mrf.mxu0
    %v198 = vadd.f32 %v36, %v197
    %v199 = vpop.f32.mrf.mxu0
    %v200 = vadd.f32 %v36, %v199
    %201 = vmatmul.bf16.gmra.mxu0 %v94
    %v202 = vpop.f32.mrf.mxu0
    %v203 = vadd.f32 %v36, %v202
    %v204 = vpop.f32.mrf.mxu0
    %v205 = vadd.f32 %v36, %v204
    %206 = vmatmul.bf16.gmra.mxu0 %v97
    %v207 = vpop.f32.mrf.mxu0
    %v208 = vadd.f32 %v36, %v207
    %v209 = vpop.f32.mrf.mxu0
    %v210 = vadd.f32 %v36, %v209
    %211 = vmatmul.bf16.gmra.mxu0 %v100
    %v212 = vpop.f32.mrf.mxu0
    %v213 = vadd.f32 %v36, %v212
    %v214 = vpop.f32.mrf.mxu0
    %v215 = vadd.f32 %v36, %v214
    %216 = vmatmul.bf16.gmra.mxu0 %v103
    %v217 = vpop.f32.mrf.mxu0
    %v218 = vadd.f32 %v36, %v217
    %v219 = vpop.f32.mrf.mxu0
    %v220 = vadd.f32 %v36, %v219
    %221 = vdwg.mxu0
    %v222 = vpack.c.bf16 %v154, %v115
    %v223 = vpack.c.bf16 %v193, %v193
    %v224 = vpack.c.bf16 %v156, %v117
    %v225 = vpack.c.bf16 %v195, %v195
    %v226 = vpack.c.bf16 %v159, %v120
    %v227 = vpack.c.bf16 %v198, %v198
    %v228 = vpack.c.bf16 %v161, %v122
    %v229 = vpack.c.bf16 %v200, %v200
    %v230 = vpack.c.bf16 %v164, %v125
    %v231 = vpack.c.bf16 %v203, %v203
    %v232 = vpack.c.bf16 %v166, %v127
    %v233 = vpack.c.bf16 %v205, %v205
    %v234 = vpack.c.bf16 %v169, %v130
    %v235 = vpack.c.bf16 %v208, %v208
    %v236 = vpack.c.bf16 %v171, %v132
    %v237 = vpack.c.bf16 %v210, %v210
    %v238 = vpack.c.bf16 %v174, %v135
    %v239 = vpack.c.bf16 %v213, %v213
    %v240 = vpack.c.bf16 %v176, %v137
    %v241 = vpack.c.bf16 %v215, %v215
    %v242 = vpack.c.bf16 %v179, %v140
    %v243 = vpack.c.bf16 %v218, %v218
    %v244 = vpack.c.bf16 %v181, %v142
    %v245 = vpack.c.bf16 %v220, %v220
    %246 = vst [vmem:[#allocation2] sm:$0xff] %v222
    %vm247 = vcmask 347136
    %248 = vst.msk [vmem:[#allocation2 + $0x8] sm:$0xf] %vm247, %v223
    %249 = vst [vmem:[#allocation2 + $0xc] sm:$0xff] %v224
    %250 = vst.msk [vmem:[#allocation2 + $0x14] sm:$0xf] %vm247, %v225
    %251 = vst [vmem:[#allocation2 + $0x18] sm:$0xff] %v226
    %252 = vst.msk [vmem:[#allocation2 + $0x20] sm:$0xf] %vm247, %v227
    %253 = vst [vmem:[#allocation2 + $0x24] sm:$0xff] %v228
    %254 = vst.msk [vmem:[#allocation2 + $0x2c] sm:$0xf] %vm247, %v229
    %255 = vst [vmem:[#allocation2 + $0x30] sm:$0xff] %v230
    %256 = vst.msk [vmem:[#allocation2 + $0x38] sm:$0xf] %vm247, %v231
    %257 = vst [vmem:[#allocation2 + $0x3c] sm:$0xff] %v232
    %258 = vst.msk [vmem:[#allocation2 + $0x44] sm:$0xf] %vm247, %v233
    %259 = vst [vmem:[#allocation2 + $0x48] sm:$0xff] %v234
    %260 = vst.msk [vmem:[#allocation2 + $0x50] sm:$0xf] %vm247, %v235
    %261 = vst [vmem:[#allocation2 + $0x54] sm:$0xff] %v236
    %262 = vst.msk [vmem:[#allocation2 + $0x5c] sm:$0xf] %vm247, %v237
    %263 = vst [vmem:[#allocation2 + $0x60] sm:$0xff] %v238
    %264 = vst.msk [vmem:[#allocation2 + $0x68] sm:$0xf] %vm247, %v239
    %265 = vst [vmem:[#allocation2 + $0x6c] sm:$0xff] %v240
    %266 = vst.msk [vmem:[#allocation2 + $0x74] sm:$0xf] %vm247, %v241
    %267 = vst [vmem:[#allocation2 + $0x78] sm:$0xff] %v242
    %268 = vst.msk [vmem:[#allocation2 + $0x80] sm:$0xf] %vm247, %v243
    %269 = vst [vmem:[#allocation2 + $0x84] sm:$0xff] %v244
    %270 = vst.msk [vmem:[#allocation2 + $0x8c] sm:$0xf] %vm247, %v245
    // Predicated region
    $region14: #{matmul_bias.1} parent=1 // pred_check
      _
    $region15: #{matmul_bias.1} parent=1 // pred_check_branch
      %272 = sbr.rel (0) target = $region17
    $region16: #{matmul_bias.1} parent=1 // pred_region
      %274 = vsyncadd [#allocation3], 0
      %s275 = sshll.u32 [#allocation2], 4
      %s276 = int_to_ptr.vmem [resolvable:$true] %s275
      %s277 = sshll.u32 %s3, 4
      %s278 = int_to_ptr.hbm [resolvable:$true] %s277
      %283 = dma.vmem_to_hbm [thread:$0]  %s276, 2304, %s278, [#allocation3], 192, 192, 12
    $region17: #{matmul_bias.1} parent=1 // pred_fallthru
      _
    // Predicated region
    $region18: #{matmul_bias.1} parent=1 // pred_check
      _
    $region19: #{matmul_bias.1} parent=1 // pred_check_branch
      %285 = sbr.rel (0) target = $region21
    $region20: #{matmul_bias.1} parent=1 // pred_region
      %287 = dma.done [#allocation3], 2304
    $region21: #{matmul_bias.1} parent=1 // pred_fallthru
      _
    %288 = vsyncpa [#allocation3], 1

</llo_original>
